<compile_context>
chip_gen: v7x
topology: tpu7x:2x2x1
jax: 0.10.0
libtpu: 0.0.40
codegen_flags: <defaults>
</compile_context>

<pallas_src>
import jax
import jax.numpy as jnp
from jax.experimental import pallas as pl
from jax.experimental.pallas import tpu as pltpu

# ---------------- problem sizes -----------------------------------------------
N = 2                # batch
C_IN = 4             # feature_dim[0]
H = W = 16           # feature_dim[1], feature_dim[2]   (powers of two -> bit tricks below)
HW = H * W           # 256 (per-sample lane extent)
NHW = N * HW         # 512 (both samples side by side on the lane axis)
C_OUT = 8            # conv output channels
KH = KW = 3          # conv kernel
N_TAPS = KH * KW     # 9
NUM_CLASSES = 10
N_HEAD = 1 + NUM_CLASSES      # fused gan + classifier rows
FLAT = C_OUT * HW             # 2048 flattened feature size

assert (W & (W - 1)) == 0 and (H & (H - 1)) == 0 and N == 2


def _tree_sum(vals):
    """Balanced sum of independent partials (no long dependent chain)."""
    while len(vals) > 1:
        nxt = [vals[i] + vals[i + 1] for i in range(0, len(vals) - 1, 2)]
        if len(vals) % 2:
            nxt.append(vals[-1])
        vals = nxt
    return vals[0]


# ---------------- fused kernel -------------------------------------------------
def fused_forward_kernel(x_ref, wconv_ref, bconv_ref, wheads_ref, bheads_ref, out_ref):
    # x_ref      : (N, C_IN, HW)          NCHW input, spatial dims flattened
    # wconv_ref  : (C_OUT, N_TAPS*C_IN)   im2col-packed conv weight
    # bconv_ref  : (C_OUT, 1)
    # wheads_ref : (C_OUT, N_HEAD, HW)    lane-dense fused gan+classifier weight
    # bheads_ref : (N_HEAD, 1)
    # out_ref    : (N_HEAD, N)            row 0 = sigmoid(gan logit), rows 1.. = class logits

    # Both samples side by side on the lane axis -> (C_IN, 512); the concat offset (256)
    # is lane-tile aligned, so this is a cheap in-register stitch.
    x_all = jnp.concatenate([x_ref[n] for n in range(N)], axis=-1)      # (C_IN, NHW)

    # Boundary masks shared by all taps / samples.  W == H == 16 are powers of two, so
    # row/col indices come from cheap bit ops on a lane iota (valid for both lane halves).
    lane = jax.lax.broadcasted_iota(jnp.int32, (C_IN, NHW), 1)
    col = lane & (W - 1)                    # x position inside a row
    row = (lane >> 4) & (H - 1)             # y position inside a sample
    not_top = row > 0
    not_bot = row < H - 1
    not_left = col > 0
    not_right = col < W - 1

    # im2col via pltpu.roll (XLU slot):  tap(ky,kx)[c, p] = x[c, p + (ky-1)*W + (kx-1)],
    # with every out-of-image position (including any cross-sample wrap of the rotation)
    # zeroed by the row/col masks — this reproduces Conv2d padding=1 exactly.
    taps = []
    for ky in range(KH):
        for kx in range(KW):
            off = (ky - 1) * W + (kx - 1)
            t = x_all if off == 0 else pltpu.roll(x_all, shift=(-off) % NHW, axis=1)
            keep = None
            if ky == 0:
                keep = not_top
            elif ky == KH - 1:
                keep = not_bot
            if kx == 0:
                keep = not_left if keep is None else keep & not_left
            elif kx == KW - 1:
                keep = not_right if keep is None else keep & not_right
            if keep is not None:
                t = jnp.where(keep, t, 0.0)
            taps.append(t)
    patches = jnp.concatenate(taps, axis=0)                             # (36, NHW), registers only

    # conv + bias + ReLU for BOTH samples as a single (8,36)x(36,512) MXU matmul; each
    # 256-lane half of the (C_OUT, HW) result is already in x.view(N,-1) flatten order.
    feat = jnp.dot(wconv_ref[...], patches, preferred_element_type=jnp.float32)
    feat = jnp.maximum(feat + bconv_ref[...], 0.0)                      # (C_OUT, NHW)

    # Fused gan+classifier heads on the VPU: for every conv channel c, multiply the
    # lane-dense weight slab (N_HEAD, HW) by the broadcast feature row and reduce over
    # lanes.  Per-channel partials are independent and tree-summed: no serialized M=1
    # MXU chain, no lane-padded (…, 11) weight, exact f32 accumulation.
    parts = [[] for _ in range(N)]
    for c in range(C_OUT):
        w_c = wheads_ref[c]                                             # (N_HEAD, HW)
        f_c = feat[c:c + 1, :]                                          # (1, NHW)
        for n in range(N):
            prod = w_c * f_c[:, n * HW:(n + 1) * HW]                    # (N_HEAD, HW)
            parts[n].append(jnp.sum(prod, axis=1, keepdims=True))       # (N_HEAD, 1)
    logits = jnp.concatenate([_tree_sum(parts[n]) for n in range(N)], axis=1)
    logits = logits + bheads_ref[...]                                   # (N_HEAD, N)

    # sigmoid on the gan row (EUP exp), then ONE merged store of all outputs.
    sig = 1.0 / (1.0 + jnp.exp(-logits))
    head_idx = jax.lax.broadcasted_iota(jnp.int32, (N_HEAD, N), 0)
    out_ref[...] = jnp.where(head_idx == 0, sig, logits)


# ---------------- pallas_call wrapper -------------------------------------------
def _vmem():
    return pl.BlockSpec(memory_space=pltpu.MemorySpace.VMEM)


@jax.jit
def custom_model_forward(x_nchw, packed):
    # Only wrapper ops: a free reshape on the way in, tiny slices / a (10,2)->(2,10)
    # transpose of the kernel result on the way out (negligible under jit).
    x_flat = x_nchw.reshape(N, C_IN, HW)
    out = pl.pallas_call(
        fused_forward_kernel,
        out_shape=jax.ShapeDtypeStruct((N_HEAD, N), jnp.float32),
        in_specs=[_vmem()] * 5,
        out_specs=_vmem(),
    )(x_flat, packed["w_conv"], packed["b_conv"], packed["w_heads"], packed["b_heads"])
    gan_prob = out[0, :]                       # sigmoid(gan logit).squeeze(1)
    class_output = jnp.transpose(out[1:, :])   # (N, NUM_CLASSES)
    return gan_prob, class_output


# ---------------- parameters (PyTorch layouts) + one-time packing ----------------
def init_torch_layout_params(key):
    """Parameters in the exact layouts nn.Conv2d / nn.Linear use."""
    k1, k2, k3, k4, k5, k6 = jax.random.split(key, 6)
    return {
        "conv_w": 0.1 * jax.random.normal(k1, (C_OUT, C_IN, KH, KW), jnp.float32),
        "conv_b": 0.1 * jax.random.normal(k2, (C_OUT,), jnp.float32),
        "wg": 0.02 * jax.random.normal(k3, (1, FLAT), jnp.float32),             # l_gan_logit.weight
        "bg": 0.02 * jax.random.normal(k4, (1,), jnp.float32),
        "wc": 0.02 * jax.random.normal(k5, (NUM_CLASSES, FLAT), jnp.float32),   # classifier.weight
        "bc": 0.02 * jax.random.normal(k6, (NUM_CLASSES,), jnp.float32),
    }


def pack_params(p):
    """One-time (load-time) re-layout into kernel-friendly, lane-dense shapes (outside jit)."""
    # conv: (O, I, KH, KW) -> (O, KH, KW, I) -> (O, 36); columns match the im2col row order
    w_conv = jnp.transpose(p["conv_w"], (0, 2, 3, 1)).reshape(C_OUT, N_TAPS * C_IN)
    b_conv = p["conv_b"].reshape(C_OUT, 1)
    # heads: fuse gan + classifier into one (N_HEAD, FLAT) weight, then expose the
    # (C_OUT, HW) structure of the NCHW-flattened feature with HW (=256) as the trailing
    # (lane) dim -> ~90 KiB lane-dense array instead of a ~1 MiB lane-padded one.
    w_all = jnp.concatenate([p["wg"], p["wc"]], axis=0)                          # (N_HEAD, FLAT)
    w_heads = jnp.transpose(w_all.reshape(N_HEAD, C_OUT, HW), (1, 0, 2))         # (C_OUT, N_HEAD, HW)
    b_heads = jnp.concatenate([p["bg"], p["bc"]]).reshape(N_HEAD, 1)
    return {"w_conv": w_conv, "b_conv": b_conv, "w_heads": w_heads, "b_heads": b_heads}


# ---------------- pure-JAX reference (correctness check only) --------------------
def reference_forward(x_nchw, p):
    hi = jax.lax.Precision.HIGHEST
    feat = jax.lax.conv_general_dilated(
        x_nchw, p["conv_w"], window_strides=(1, 1), padding=((1, 1), (1, 1)),
        dimension_numbers=("NCHW", "OIHW", "NCHW"), precision=hi)
    feat = jnp.maximum(feat + p["conv_b"][None, :, None, None], 0.0)
    flat = feat.reshape(x_nchw.shape[0], -1)
    gan = jax.nn.sigmoid(jnp.dot(flat, p["wg"].T, precision=hi) + p["bg"])[:, 0]
    cls = jnp.dot(flat, p["wc"].T, precision=hi) + p["bc"]
    return gan, cls


if __name__ == "__main__":
    key = jax.random.PRNGKey(0)
    kx, kp = jax.random.split(key)
    x = jax.random.normal(kx, (N, C_IN, H, W), jnp.float32)

    params = init_torch_layout_params(kp)
    packed = pack_params(params)                  # one-time weight repack (outside jit)

    gan_prob, class_output = custom_model_forward(x, packed)
    jax.block_until_ready((gan_prob, class_output))

    assert gan_prob.shape == (N,)
    assert class_output.shape == (N, NUM_CLASSES)
    assert bool(jnp.all((gan_prob >= 0.0) & (gan_prob <= 1.0)))

    # numerical check vs a plain-JAX reference (tolerance covers MXU conv-matmul precision;
    # the K=2048 head contraction is exact f32 on the VPU now)
    gan_want, cls_want = reference_forward(x, params)
    assert bool(jnp.allclose(gan_prob, gan_want, atol=2e-2, rtol=2e-2))
    assert bool(jnp.allclose(class_output, cls_want, atol=2e-2, rtol=2e-2))

    print("KERNEL_OK")
</pallas_src>

<mosaic_0001>
module attributes {stable_mosaic.version = 11 : i64} {
  func.func @fused_forward_kernel(%arg0: memref<2x4x256xf32, #tpu.memory_space<vmem>>, %arg1: memref<8x36xf32, #tpu.memory_space<vmem>>, %arg2: memref<8x1xf32, #tpu.memory_space<vmem>>, %arg3: memref<8x11x256xf32, #tpu.memory_space<vmem>>, %arg4: memref<11x1xf32, #tpu.memory_space<vmem>>, %arg5: memref<11x2xf32, #tpu.memory_space<vmem>>) attributes {dimension_semantics = [], scalar_prefetch = 0 : i64, scratch_operands = 0 : i64, tpu.core_type = #tpu.core_type<tc>} {
    %c0 = arith.constant 0 : index
    %c0_0 = arith.constant 0 : index
    %c0_1 = arith.constant 0 : index
    %0 = vector.load %arg0[%c0, %c0_0, %c0_1] : memref<2x4x256xf32, #tpu.memory_space<vmem>>, vector<1x4x256xf32>
    %1 = vector.shape_cast %0 : vector<1x4x256xf32> to vector<4x256xf32>
    %c1 = arith.constant 1 : index
    %c0_2 = arith.constant 0 : index
    %c0_3 = arith.constant 0 : index
    %2 = vector.load %arg0[%c1, %c0_2, %c0_3] : memref<2x4x256xf32, #tpu.memory_space<vmem>>, vector<1x4x256xf32>
    %3 = vector.shape_cast %2 : vector<1x4x256xf32> to vector<4x256xf32>
    %4 = tpu.concatenate %1, %3 in 1 : vector<4x256xf32>, vector<4x256xf32> -> vector<4x512xf32>
    %5 = tpu.iota {dimensions = array<i32: 1>} : vector<4x512xi32>
    %c15_i32 = arith.constant 15 : i32
    %6 = vector.broadcast %c15_i32 : i32 to vector<4x512xi32>
    %7 = arith.andi %5, %6 : vector<4x512xi32>
    %c4_i32 = arith.constant 4 : i32
    %8 = vector.broadcast %c4_i32 : i32 to vector<4x512xi32>
    %9 = arith.shrsi %5, %8 : vector<4x512xi32>
    %c15_i32_4 = arith.constant 15 : i32
    %10 = vector.broadcast %c15_i32_4 : i32 to vector<4x512xi32>
    %11 = arith.andi %9, %10 : vector<4x512xi32>
    %c0_i32 = arith.constant 0 : i32
    %12 = vector.broadcast %c0_i32 : i32 to vector<4x512xi32>
    %13 = arith.cmpi sgt, %11, %12 : vector<4x512xi32>
    %c15_i32_5 = arith.constant 15 : i32
    %14 = vector.broadcast %c15_i32_5 : i32 to vector<4x512xi32>
    %15 = arith.cmpi slt, %11, %14 : vector<4x512xi32>
    %c0_i32_6 = arith.constant 0 : i32
    %16 = vector.broadcast %c0_i32_6 : i32 to vector<4x512xi32>
    %17 = arith.cmpi sgt, %7, %16 : vector<4x512xi32>
    %c15_i32_7 = arith.constant 15 : i32
    %18 = vector.broadcast %c15_i32_7 : i32 to vector<4x512xi32>
    %19 = arith.cmpi slt, %7, %18 : vector<4x512xi32>
    %c17_i32 = arith.constant 17 : i32
    %20 = tpu.dynamic_rotate %4 by %c17_i32 dim 1 : vector<4x512xf32>, i32 -> vector<4x512xf32>
    %21 = arith.andi %13, %17 : vector<4x512xi1>
    %cst = arith.constant 0.000000e+00 : f32
    %22 = vector.broadcast %cst : f32 to vector<4x512xf32>
    %23 = arith.select %21, %20, %22 : vector<4x512xi1>, vector<4x512xf32>
    %c16_i32 = arith.constant 16 : i32
    %24 = tpu.dynamic_rotate %4 by %c16_i32 dim 1 : vector<4x512xf32>, i32 -> vector<4x512xf32>
    %cst_8 = arith.constant 0.000000e+00 : f32
    %25 = vector.broadcast %cst_8 : f32 to vector<4x512xf32>
    %26 = arith.select %13, %24, %25 : vector<4x512xi1>, vector<4x512xf32>
    %c15_i32_9 = arith.constant 15 : i32
    %27 = tpu.dynamic_rotate %4 by %c15_i32_9 dim 1 : vector<4x512xf32>, i32 -> vector<4x512xf32>
    %28 = arith.andi %13, %19 : vector<4x512xi1>
    %cst_10 = arith.constant 0.000000e+00 : f32
    %29 = vector.broadcast %cst_10 : f32 to vector<4x512xf32>
    %30 = arith.select %28, %27, %29 : vector<4x512xi1>, vector<4x512xf32>
    %c1_i32 = arith.constant 1 : i32
    %31 = tpu.dynamic_rotate %4 by %c1_i32 dim 1 : vector<4x512xf32>, i32 -> vector<4x512xf32>
    %cst_11 = arith.constant 0.000000e+00 : f32
    %32 = vector.broadcast %cst_11 : f32 to vector<4x512xf32>
    %33 = arith.select %17, %31, %32 : vector<4x512xi1>, vector<4x512xf32>
    %c511_i32 = arith.constant 511 : i32
    %34 = tpu.dynamic_rotate %4 by %c511_i32 dim 1 : vector<4x512xf32>, i32 -> vector<4x512xf32>
    %cst_12 = arith.constant 0.000000e+00 : f32
    %35 = vector.broadcast %cst_12 : f32 to vector<4x512xf32>
    %36 = arith.select %19, %34, %35 : vector<4x512xi1>, vector<4x512xf32>
    %c497_i32 = arith.constant 497 : i32
    %37 = tpu.dynamic_rotate %4 by %c497_i32 dim 1 : vector<4x512xf32>, i32 -> vector<4x512xf32>
    %38 = arith.andi %15, %17 : vector<4x512xi1>
    %cst_13 = arith.constant 0.000000e+00 : f32
    %39 = vector.broadcast %cst_13 : f32 to vector<4x512xf32>
    %40 = arith.select %38, %37, %39 : vector<4x512xi1>, vector<4x512xf32>
    %c496_i32 = arith.constant 496 : i32
    %41 = tpu.dynamic_rotate %4 by %c496_i32 dim 1 : vector<4x512xf32>, i32 -> vector<4x512xf32>
    %cst_14 = arith.constant 0.000000e+00 : f32
    %42 = vector.broadcast %cst_14 : f32 to vector<4x512xf32>
    %43 = arith.select %15, %41, %42 : vector<4x512xi1>, vector<4x512xf32>
    %c495_i32 = arith.constant 495 : i32
    %44 = tpu.dynamic_rotate %4 by %c495_i32 dim 1 : vector<4x512xf32>, i32 -> vector<4x512xf32>
    %45 = arith.andi %15, %19 : vector<4x512xi1>
    %cst_15 = arith.constant 0.000000e+00 : f32
    %46 = vector.broadcast %cst_15 : f32 to vector<4x512xf32>
    %47 = arith.select %45, %44, %46 : vector<4x512xi1>, vector<4x512xf32>
    %48 = tpu.concatenate %23, %26, %30, %33, %4, %36, %40, %43, %47 in 0 : vector<4x512xf32>, vector<4x512xf32>, vector<4x512xf32>, vector<4x512xf32>, vector<4x512xf32>, vector<4x512xf32>, vector<4x512xf32>, vector<4x512xf32>, vector<4x512xf32> -> vector<36x512xf32>
    %c0_16 = arith.constant 0 : index
    %c0_17 = arith.constant 0 : index
    %49 = vector.load %arg1[%c0_16, %c0_17] : memref<8x36xf32, #tpu.memory_space<vmem>>, vector<8x36xf32>
    %cst_18 = arith.constant dense<0.000000e+00> : vector<8x512xf32>
    %50 = tpu.matmul %49, %48, %cst_18 {dimension_numbers = #tpu.dot_dimension_numbers<[1], [0], [0], [1], [0, 0, 1, 1], [], []>} : vector<8x36xf32>, vector<36x512xf32>, vector<8x512xf32> -> vector<8x512xf32>
    %c0_19 = arith.constant 0 : index
    %c0_20 = arith.constant 0 : index
    %51 = vector.load %arg2[%c0_19, %c0_20] : memref<8x1xf32, #tpu.memory_space<vmem>>, vector<8x1xf32>
    %52 = vector.broadcast %51 : vector<8x1xf32> to vector<8x512xf32>
    %53 = arith.addf %50, %52 : vector<8x512xf32>
    %cst_21 = arith.constant 0.000000e+00 : f32
    %54 = vector.broadcast %cst_21 : f32 to vector<8x512xf32>
    %55 = arith.maximumf %53, %54 : vector<8x512xf32>
    %c0_22 = arith.constant 0 : index
    %c0_23 = arith.constant 0 : index
    %c0_24 = arith.constant 0 : index
    %56 = vector.load %arg3[%c0_22, %c0_23, %c0_24] : memref<8x11x256xf32, #tpu.memory_space<vmem>>, vector<1x11x256xf32>
    %57 = vector.shape_cast %56 : vector<1x11x256xf32> to vector<11x256xf32>
    %58 = vector.extract_strided_slice %55 {offsets = [0, 0], sizes = [1, 512], strides = [1, 1]} : vector<8x512xf32> to vector<1x512xf32>
    %59 = vector.extract_strided_slice %58 {offsets = [0, 0], sizes = [1, 256], strides = [1, 1]} : vector<1x512xf32> to vector<1x256xf32>
    %60 = vector.broadcast %59 : vector<1x256xf32> to vector<11x256xf32>
    %61 = arith.mulf %57, %60 : vector<11x256xf32>
    %cst_25 = arith.constant dense<0.000000e+00> : vector<11xf32>
    %62 = vector.multi_reduction <add>, %61, %cst_25 [1] : vector<11x256xf32> to vector<11xf32>
    %63 = vector.shape_cast %62 : vector<11xf32> to vector<11x1xf32>
    %64 = vector.extract_strided_slice %58 {offsets = [0, 256], sizes = [1, 256], strides = [1, 1]} : vector<1x512xf32> to vector<1x256xf32>
    %65 = vector.broadcast %64 : vector<1x256xf32> to vector<11x256xf32>
    %66 = arith.mulf %57, %65 : vector<11x256xf32>
    %cst_26 = arith.constant dense<0.000000e+00> : vector<11xf32>
    %67 = vector.multi_reduction <add>, %66, %cst_26 [1] : vector<11x256xf32> to vector<11xf32>
    %68 = vector.shape_cast %67 : vector<11xf32> to vector<11x1xf32>
    %c1_27 = arith.constant 1 : index
    %c0_28 = arith.constant 0 : index
    %c0_29 = arith.constant 0 : index
    %69 = vector.load %arg3[%c1_27, %c0_28, %c0_29] : memref<8x11x256xf32, #tpu.memory_space<vmem>>, vector<1x11x256xf32>
    %70 = vector.shape_cast %69 : vector<1x11x256xf32> to vector<11x256xf32>
    %71 = vector.extract_strided_slice %55 {offsets = [1, 0], sizes = [1, 512], strides = [1, 1]} : vector<8x512xf32> to vector<1x512xf32>
    %72 = vector.extract_strided_slice %71 {offsets = [0, 0], sizes = [1, 256], strides = [1, 1]} : vector<1x512xf32> to vector<1x256xf32>
    %73 = vector.broadcast %72 : vector<1x256xf32> to vector<11x256xf32>
    %74 = arith.mulf %70, %73 : vector<11x256xf32>
    %cst_30 = arith.constant dense<0.000000e+00> : vector<11xf32>
    %75 = vector.multi_reduction <add>, %74, %cst_30 [1] : vector<11x256xf32> to vector<11xf32>
    %76 = vector.shape_cast %75 : vector<11xf32> to vector<11x1xf32>
    %77 = vector.extract_strided_slice %71 {offsets = [0, 256], sizes = [1, 256], strides = [1, 1]} : vector<1x512xf32> to vector<1x256xf32>
    %78 = vector.broadcast %77 : vector<1x256xf32> to vector<11x256xf32>
    %79 = arith.mulf %70, %78 : vector<11x256xf32>
    %cst_31 = arith.constant dense<0.000000e+00> : vector<11xf32>
    %80 = vector.multi_reduction <add>, %79, %cst_31 [1] : vector<11x256xf32> to vector<11xf32>
    %81 = vector.shape_cast %80 : vector<11xf32> to vector<11x1xf32>
    %c2 = arith.constant 2 : index
    %c0_32 = arith.constant 0 : index
    %c0_33 = arith.constant 0 : index
    %82 = vector.load %arg3[%c2, %c0_32, %c0_33] : memref<8x11x256xf32, #tpu.memory_space<vmem>>, vector<1x11x256xf32>
    %83 = vector.shape_cast %82 : vector<1x11x256xf32> to vector<11x256xf32>
    %84 = vector.extract_strided_slice %55 {offsets = [2, 0], sizes = [1, 512], strides = [1, 1]} : vector<8x512xf32> to vector<1x512xf32>
    %85 = vector.extract_strided_slice %84 {offsets = [0, 0], sizes = [1, 256], strides = [1, 1]} : vector<1x512xf32> to vector<1x256xf32>
    %86 = vector.broadcast %85 : vector<1x256xf32> to vector<11x256xf32>
    %87 = arith.mulf %83, %86 : vector<11x256xf32>
    %cst_34 = arith.constant dense<0.000000e+00> : vector<11xf32>
    %88 = vector.multi_reduction <add>, %87, %cst_34 [1] : vector<11x256xf32> to vector<11xf32>
    %89 = vector.shape_cast %88 : vector<11xf32> to vector<11x1xf32>
    %90 = vector.extract_strided_slice %84 {offsets = [0, 256], sizes = [1, 256], strides = [1, 1]} : vector<1x512xf32> to vector<1x256xf32>
    %91 = vector.broadcast %90 : vector<1x256xf32> to vector<11x256xf32>
    %92 = arith.mulf %83, %91 : vector<11x256xf32>
    %cst_35 = arith.constant dense<0.000000e+00> : vector<11xf32>
    %93 = vector.multi_reduction <add>, %92, %cst_35 [1] : vector<11x256xf32> to vector<11xf32>
    %94 = vector.shape_cast %93 : vector<11xf32> to vector<11x1xf32>
    %c3 = arith.constant 3 : index
    %c0_36 = arith.constant 0 : index
    %c0_37 = arith.constant 0 : index
    %95 = vector.load %arg3[%c3, %c0_36, %c0_37] : memref<8x11x256xf32, #tpu.memory_space<vmem>>, vector<1x11x256xf32>
    %96 = vector.shape_cast %95 : vector<1x11x256xf32> to vector<11x256xf32>
    %97 = vector.extract_strided_slice %55 {offsets = [3, 0], sizes = [1, 512], strides = [1, 1]} : vector<8x512xf32> to vector<1x512xf32>
    %98 = vector.extract_strided_slice %97 {offsets = [0, 0], sizes = [1, 256], strides = [1, 1]} : vector<1x512xf32> to vector<1x256xf32>
    %99 = vector.broadcast %98 : vector<1x256xf32> to vector<11x256xf32>
    %100 = arith.mulf %96, %99 : vector<11x256xf32>
    %cst_38 = arith.constant dense<0.000000e+00> : vector<11xf32>
    %101 = vector.multi_reduction <add>, %100, %cst_38 [1] : vector<11x256xf32> to vector<11xf32>
    %102 = vector.shape_cast %101 : vector<11xf32> to vector<11x1xf32>
    %103 = vector.extract_strided_slice %97 {offsets = [0, 256], sizes = [1, 256], strides = [1, 1]} : vector<1x512xf32> to vector<1x256xf32>
    %104 = vector.broadcast %103 : vector<1x256xf32> to vector<11x256xf32>
    %105 = arith.mulf %96, %104 : vector<11x256xf32>
    %cst_39 = arith.constant dense<0.000000e+00> : vector<11xf32>
    %106 = vector.multi_reduction <add>, %105, %cst_39 [1] : vector<11x256xf32> to vector<11xf32>
    %107 = vector.shape_cast %106 : vector<11xf32> to vector<11x1xf32>
    %c4 = arith.constant 4 : index
    %c0_40 = arith.constant 0 : index
    %c0_41 = arith.constant 0 : index
    %108 = vector.load %arg3[%c4, %c0_40, %c0_41] : memref<8x11x256xf32, #tpu.memory_space<vmem>>, vector<1x11x256xf32>
    %109 = vector.shape_cast %108 : vector<1x11x256xf32> to vector<11x256xf32>
    %110 = vector.extract_strided_slice %55 {offsets = [4, 0], sizes = [1, 512], strides = [1, 1]} : vector<8x512xf32> to vector<1x512xf32>
    %111 = vector.extract_strided_slice %110 {offsets = [0, 0], sizes = [1, 256], strides = [1, 1]} : vector<1x512xf32> to vector<1x256xf32>
    %112 = vector.broadcast %111 : vector<1x256xf32> to vector<11x256xf32>
    %113 = arith.mulf %109, %112 : vector<11x256xf32>
    %cst_42 = arith.constant dense<0.000000e+00> : vector<11xf32>
    %114 = vector.multi_reduction <add>, %113, %cst_42 [1] : vector<11x256xf32> to vector<11xf32>
    %115 = vector.shape_cast %114 : vector<11xf32> to vector<11x1xf32>
    %116 = vector.extract_strided_slice %110 {offsets = [0, 256], sizes = [1, 256], strides = [1, 1]} : vector<1x512xf32> to vector<1x256xf32>
    %117 = vector.broadcast %116 : vector<1x256xf32> to vector<11x256xf32>
    %118 = arith.mulf %109, %117 : vector<11x256xf32>
    %cst_43 = arith.constant dense<0.000000e+00> : vector<11xf32>
    %119 = vector.multi_reduction <add>, %118, %cst_43 [1] : vector<11x256xf32> to vector<11xf32>
    %120 = vector.shape_cast %119 : vector<11xf32> to vector<11x1xf32>
    %c5 = arith.constant 5 : index
    %c0_44 = arith.constant 0 : index
    %c0_45 = arith.constant 0 : index
    %121 = vector.load %arg3[%c5, %c0_44, %c0_45] : memref<8x11x256xf32, #tpu.memory_space<vmem>>, vector<1x11x256xf32>
    %122 = vector.shape_cast %121 : vector<1x11x256xf32> to vector<11x256xf32>
    %123 = vector.extract_strided_slice %55 {offsets = [5, 0], sizes = [1, 512], strides = [1, 1]} : vector<8x512xf32> to vector<1x512xf32>
    %124 = vector.extract_strided_slice %123 {offsets = [0, 0], sizes = [1, 256], strides = [1, 1]} : vector<1x512xf32> to vector<1x256xf32>
    %125 = vector.broadcast %124 : vector<1x256xf32> to vector<11x256xf32>
    %126 = arith.mulf %122, %125 : vector<11x256xf32>
    %cst_46 = arith.constant dense<0.000000e+00> : vector<11xf32>
    %127 = vector.multi_reduction <add>, %126, %cst_46 [1] : vector<11x256xf32> to vector<11xf32>
    %128 = vector.shape_cast %127 : vector<11xf32> to vector<11x1xf32>
    %129 = vector.extract_strided_slice %123 {offsets = [0, 256], sizes = [1, 256], strides = [1, 1]} : vector<1x512xf32> to vector<1x256xf32>
    %130 = vector.broadcast %129 : vector<1x256xf32> to vector<11x256xf32>
    %131 = arith.mulf %122, %130 : vector<11x256xf32>
    %cst_47 = arith.constant dense<0.000000e+00> : vector<11xf32>
    %132 = vector.multi_reduction <add>, %131, %cst_47 [1] : vector<11x256xf32> to vector<11xf32>
    %133 = vector.shape_cast %132 : vector<11xf32> to vector<11x1xf32>
    %c6 = arith.constant 6 : index
    %c0_48 = arith.constant 0 : index
    %c0_49 = arith.constant 0 : index
    %134 = vector.load %arg3[%c6, %c0_48, %c0_49] : memref<8x11x256xf32, #tpu.memory_space<vmem>>, vector<1x11x256xf32>
    %135 = vector.shape_cast %134 : vector<1x11x256xf32> to vector<11x256xf32>
    %136 = vector.extract_strided_slice %55 {offsets = [6, 0], sizes = [1, 512], strides = [1, 1]} : vector<8x512xf32> to vector<1x512xf32>
    %137 = vector.extract_strided_slice %136 {offsets = [0, 0], sizes = [1, 256], strides = [1, 1]} : vector<1x512xf32> to vector<1x256xf32>
    %138 = vector.broadcast %137 : vector<1x256xf32> to vector<11x256xf32>
    %139 = arith.mulf %135, %138 : vector<11x256xf32>
    %cst_50 = arith.constant dense<0.000000e+00> : vector<11xf32>
    %140 = vector.multi_reduction <add>, %139, %cst_50 [1] : vector<11x256xf32> to vector<11xf32>
    %141 = vector.shape_cast %140 : vector<11xf32> to vector<11x1xf32>
    %142 = vector.extract_strided_slice %136 {offsets = [0, 256], sizes = [1, 256], strides = [1, 1]} : vector<1x512xf32> to vector<1x256xf32>
    %143 = vector.broadcast %142 : vector<1x256xf32> to vector<11x256xf32>
    %144 = arith.mulf %135, %143 : vector<11x256xf32>
    %cst_51 = arith.constant dense<0.000000e+00> : vector<11xf32>
    %145 = vector.multi_reduction <add>, %144, %cst_51 [1] : vector<11x256xf32> to vector<11xf32>
    %146 = vector.shape_cast %145 : vector<11xf32> to vector<11x1xf32>
    %c7 = arith.constant 7 : index
    %c0_52 = arith.constant 0 : index
    %c0_53 = arith.constant 0 : index
    %147 = vector.load %arg3[%c7, %c0_52, %c0_53] : memref<8x11x256xf32, #tpu.memory_space<vmem>>, vector<1x11x256xf32>
    %148 = vector.shape_cast %147 : vector<1x11x256xf32> to vector<11x256xf32>
    %149 = vector.extract_strided_slice %55 {offsets = [7, 0], sizes = [1, 512], strides = [1, 1]} : vector<8x512xf32> to vector<1x512xf32>
    %150 = vector.extract_strided_slice %149 {offsets = [0, 0], sizes = [1, 256], strides = [1, 1]} : vector<1x512xf32> to vector<1x256xf32>
    %151 = vector.broadcast %150 : vector<1x256xf32> to vector<11x256xf32>
    %152 = arith.mulf %148, %151 : vector<11x256xf32>
    %cst_54 = arith.constant dense<0.000000e+00> : vector<11xf32>
    %153 = vector.multi_reduction <add>, %152, %cst_54 [1] : vector<11x256xf32> to vector<11xf32>
    %154 = vector.shape_cast %153 : vector<11xf32> to vector<11x1xf32>
    %155 = vector.extract_strided_slice %149 {offsets = [0, 256], sizes = [1, 256], strides = [1, 1]} : vector<1x512xf32> to vector<1x256xf32>
    %156 = vector.broadcast %155 : vector<1x256xf32> to vector<11x256xf32>
    %157 = arith.mulf %148, %156 : vector<11x256xf32>
    %cst_55 = arith.constant dense<0.000000e+00> : vector<11xf32>
    %158 = vector.multi_reduction <add>, %157, %cst_55 [1] : vector<11x256xf32> to vector<11xf32>
    %159 = vector.shape_cast %158 : vector<11xf32> to vector<11x1xf32>
    %160 = arith.addf %63, %76 : vector<11x1xf32>
    %161 = arith.addf %89, %102 : vector<11x1xf32>
    %162 = arith.addf %115, %128 : vector<11x1xf32>
    %163 = arith.addf %141, %154 : vector<11x1xf32>
    %164 = arith.addf %160, %161 : vector<11x1xf32>
    %165 = arith.addf %162, %163 : vector<11x1xf32>
    %166 = arith.addf %164, %165 : vector<11x1xf32>
    %167 = arith.addf %68, %81 : vector<11x1xf32>
    %168 = arith.addf %94, %107 : vector<11x1xf32>
    %169 = arith.addf %120, %133 : vector<11x1xf32>
    %170 = arith.addf %146, %159 : vector<11x1xf32>
    %171 = arith.addf %167, %168 : vector<11x1xf32>
    %172 = arith.addf %169, %170 : vector<11x1xf32>
    %173 = arith.addf %171, %172 : vector<11x1xf32>
    %174 = tpu.concatenate %166, %173 in 1 : vector<11x1xf32>, vector<11x1xf32> -> vector<11x2xf32>
    %c0_56 = arith.constant 0 : index
    %c0_57 = arith.constant 0 : index
    %175 = vector.load %arg4[%c0_56, %c0_57] : memref<11x1xf32, #tpu.memory_space<vmem>>, vector<11x1xf32>
    %176 = vector.broadcast %175 : vector<11x1xf32> to vector<11x2xf32>
    %177 = arith.addf %174, %176 : vector<11x2xf32>
    %cst_58 = arith.constant 0.000000e+00 : f32
    %178 = vector.broadcast %cst_58 : f32 to vector<11x2xf32>
    %179 = arith.subf %178, %177 : vector<11x2xf32>
    %180 = math.exp %179 : vector<11x2xf32>
    %cst_59 = arith.constant 1.000000e+00 : f32
    %181 = vector.broadcast %cst_59 : f32 to vector<11x2xf32>
    %182 = arith.addf %181, %180 : vector<11x2xf32>
    %cst_60 = arith.constant 1.000000e+00 : f32
    %183 = vector.broadcast %cst_60 : f32 to vector<11x2xf32>
    %184 = arith.divf %183, %182 : vector<11x2xf32>
    %185 = tpu.iota {dimensions = array<i32: 0>} : vector<11x2xi32>
    %c0_i32_61 = arith.constant 0 : i32
    %186 = vector.broadcast %c0_i32_61 : i32 to vector<11x2xi32>
    %187 = arith.cmpi eq, %185, %186 : vector<11x2xi32>
    %188 = arith.select %187, %184, %177 : vector<11x2xi1>, vector<11x2xf32>
    %c0_62 = arith.constant 0 : index
    %c0_63 = arith.constant 0 : index
    %189 = vector.load %arg5[%c0_62, %c0_63] : memref<11x2xf32, #tpu.memory_space<vmem>>, vector<11x2xf32>
    tpu.vector_store %arg5[%c0_62, %c0_63], %188 {strides = array<i32>} : memref<11x2xf32, #tpu.memory_space<vmem>>, vector<11x2xf32>,
    return
  }
}

</mosaic_0001>

<llo_original>
// kernel: custom_model_forward.1
$region0: #{custom_model_forward.1}
  #allocation0 [shape = 'u32[]', space=smem, size = 0x4, offset = 0x4, fixed_abs, tag = 'smem constant byte address 0x4 - core index']
  #allocation1 [shape = 'u32[144,128]{1,0:T(1,128)}', space=vmem, size = 0x12000, scoped, tag = 'internal scratch']
  %s0 = inlined_call_operand.vmem [shape: f32[2,4,256], index: 0, kind: input, shape index: {}]
  %s1 = inlined_call_operand.vmem [shape: f32[8,36], index: 1, kind: input, shape index: {}]
  %s2 = inlined_call_operand.vmem [shape: f32[8,1], index: 2, kind: input, shape index: {}]
  %s3 = inlined_call_operand.vmem [shape: f32[8,11,256], index: 3, kind: input, shape index: {}]
  %s4 = inlined_call_operand.vmem [shape: f32[11,1], index: 4, kind: input, shape index: {}]
  %s5 = inlined_call_operand.vmem [shape: f32[11,2], index: 5, kind: output, shape index: {}]
  %s6 = sld [smem:[#allocation0]]
  $region30: #{custom_model_forward.1} parent=0
    _
  %s8 = ssub.s32 1, %s6
  %s9 = scalar_select 0, %s8, %s6
  // Predicated region
  $region2: #{custom_model_forward.1} parent=0 // pred_check
    _
  $region3: #{custom_model_forward.1} parent=0 // pred_check_branch
    %11 = sbr.rel (0) target = $region5
  $region4: #{custom_model_forward.1} parent=0 // pred_region
    _
  $region5: #{custom_model_forward.1} parent=0 // pred_fallthru
    _
  // Predicated region
  $region6: #{custom_model_forward.1} parent=0 // pred_check
    _
  $region7: #{custom_model_forward.1} parent=0 // pred_check_branch
    %13 = sbr.rel (0) target = $region9
  $region8: #{custom_model_forward.1} parent=0 // pred_region
    _
  $region9: #{custom_model_forward.1} parent=0 // pred_fallthru
    _
  // Predicated region
  $region10: #{custom_model_forward.1} parent=0 // pred_check
    _
  $region11: #{custom_model_forward.1} parent=0 // pred_check_branch
    %15 = sbr.rel (0) target = $region13
  $region12: #{custom_model_forward.1} parent=0 // pred_region
    _
  $region13: #{custom_model_forward.1} parent=0 // pred_fallthru
    _
  // Predicated region
  $region14: #{custom_model_forward.1} parent=0 // pred_check
    _
  $region15: #{custom_model_forward.1} parent=0 // pred_check_branch
    %17 = sbr.rel (0) target = $region17
  $region16: #{custom_model_forward.1} parent=0 // pred_region
    _
  $region17: #{custom_model_forward.1} parent=0 // pred_fallthru
    _
  // Predicated region
  $region18: #{custom_model_forward.1} parent=0 // pred_check
    _
  $region19: #{custom_model_forward.1} parent=0 // pred_check_branch
    %19 = sbr.rel (0) target = $region21
  $region20: #{custom_model_forward.1} parent=0 // pred_region
    _
  $region21: #{custom_model_forward.1} parent=0 // pred_fallthru
    _
  %v20 = vld [vmem:[%s0] sm:$0xff]
  %s21 = scalar_lea.vmem %s0, 8
  %v22 = vld [vmem:[%s21] sm:$0xff]
  %v24 = vcombine.high %v20, %v20
  %v27 = vcombine.high %v22, %v22
  %v29 = vlaneseq
  %v30 = vand.u32 %v29, 127
  %v31 = vadd.s32 %v30, 128
  %v32 = vadd.s32 %v30, 256
  %v33 = vadd.s32 %v30, 384
  %v34 = vand.u32 %v30, 15
  %v35 = vand.u32 %v31, 15
  %v36 = vand.u32 %v32, 15
  %v37 = vand.u32 %v33, 15
  %v38 = vshra.s32 %v30, 4
  %v39 = vshra.s32 %v31, 4
  %v40 = vshra.s32 %v32, 4
  %v41 = vshra.s32 %v33, 4
  %v42 = vand.u32 %v38, 15
  %v43 = vand.u32 %v39, 15
  %v44 = vand.u32 %v40, 15
  %v45 = vand.u32 %v41, 15
  %vm46 = vcmp.gt.s32.totalorder %v42, 0
  %vm47 = vcmp.gt.s32.totalorder %v43, 0
  %vm48 = vcmp.gt.s32.totalorder %v44, 0
  %vm49 = vcmp.gt.s32.totalorder %v45, 0
  %vm50 = vcmp.lt.s32.totalorder %v42, 15
  %vm51 = vcmp.lt.s32.totalorder %v43, 15
  %vm52 = vcmp.lt.s32.totalorder %v44, 15
  %vm53 = vcmp.lt.s32.totalorder %v45, 15
  %vm54 = vcmp.gt.s32.totalorder %v34, 0
  %vm55 = vcmp.gt.s32.totalorder %v35, 0
  %vm56 = vcmp.gt.s32.totalorder %v36, 0
  %vm57 = vcmp.gt.s32.totalorder %v37, 0
  %vm58 = vcmp.lt.s32.totalorder %v34, 15
  %vm59 = vcmp.lt.s32.totalorder %v35, 15
  %vm60 = vcmp.lt.s32.totalorder %v36, 15
  %vm61 = vcmp.lt.s32.totalorder %v37, 15
  %62 = vrot.lane.b32.xlu0 %v20, 17
  %v63 = vpop.permute.xlu0 %62
  %64 = vrot.lane.b32.xlu0 %v24, 17
  %v65 = vpop.permute.xlu0 %64
  %66 = vrot.lane.b32.xlu0 %v22, 17
  %v67 = vpop.permute.xlu0 %66
  %68 = vrot.lane.b32.xlu0 %v27, 17
  %v69 = vpop.permute.xlu0 %68
  %vm70 = vcmp.lt.s32.totalorder %v30, 17
  %v71 = vsel %vm70, %v67, %v69
  %v72 = vsel %vm70, %v65, %v67
  %v73 = vsel %vm70, %v63, %v65
  %v74 = vsel %vm70, %v69, %v63
  %vm75 = vmand %vm46, %vm54
  %vm76 = vmand %vm47, %vm55
  %vm77 = vmand %vm48, %vm56
  %vm78 = vmand %vm49, %vm57
  %v79 = vsel %vm75, %v74, 0.0
  %v80 = vsel %vm76, %v73, 0.0
  %v81 = vsel %vm77, %v72, 0.0
  %v82 = vsel %vm78, %v71, 0.0
  %83 = vrot.lane.b32.xlu0 %v20, 16
  %v84 = vpop.permute.xlu0 %83
  %85 = vrot.lane.b32.xlu0 %v24, 16
  %v86 = vpop.permute.xlu0 %85
  %87 = vrot.lane.b32.xlu0 %v22, 16
  %v88 = vpop.permute.xlu0 %87
  %89 = vrot.lane.b32.xlu0 %v27, 16
  %v90 = vpop.permute.xlu0 %89
  %vm91 = vcmp.lt.s32.totalorder %v30, 16
  %v92 = vsel %vm91, %v88, %v90
  %v93 = vsel %vm91, %v86, %v88
  %v94 = vsel %vm91, %v84, %v86
  %v95 = vsel %vm91, %v90, %v84
  %v96 = vsel %vm46, %v95, 0.0
  %v97 = vsel %vm47, %v94, 0.0
  %v98 = vsel %vm48, %v93, 0.0
  %v99 = vsel %vm49, %v92, 0.0
  %100 = vrot.lane.b32.xlu0 %v20, 15
  %v101 = vpop.permute.xlu0 %100
  %102 = vrot.lane.b32.xlu0 %v24, 15
  %v103 = vpop.permute.xlu0 %102
  %104 = vrot.lane.b32.xlu0 %v22, 15
  %v105 = vpop.permute.xlu0 %104
  %106 = vrot.lane.b32.xlu0 %v27, 15
  %v107 = vpop.permute.xlu0 %106
  %vm108 = vcmp.lt.s32.totalorder %v30, 15
  %v109 = vsel %vm108, %v105, %v107
  %v110 = vsel %vm108, %v103, %v105
  %v111 = vsel %vm108, %v101, %v103
  %v112 = vsel %vm108, %v107, %v101
  %vm113 = vmand %vm46, %vm58
  %vm114 = vmand %vm47, %vm59
  %vm115 = vmand %vm48, %vm60
  %vm116 = vmand %vm49, %vm61
  %v117 = vsel %vm113, %v112, 0.0
  %v118 = vsel %vm114, %v111, 0.0
  %v119 = vsel %vm115, %v110, 0.0
  %v120 = vsel %vm116, %v109, 0.0
  %121 = vrot.lane.b32.xlu0 %v20, 1
  %v122 = vpop.permute.xlu0 %121
  %123 = vrot.lane.b32.xlu0 %v24, 1
  %v124 = vpop.permute.xlu0 %123
  %125 = vrot.lane.b32.xlu0 %v22, 1
  %v126 = vpop.permute.xlu0 %125
  %127 = vrot.lane.b32.xlu0 %v27, 1
  %v128 = vpop.permute.xlu0 %127
  %vm129 = vcmp.lt.s32.totalorder %v30, 1
  %v130 = vsel %vm129, %v126, %v128
  %v131 = vsel %vm129, %v124, %v126
  %v132 = vsel %vm129, %v122, %v124
  %v133 = vsel %vm129, %v128, %v122
  %v134 = vsel %vm54, %v133, 0.0
  %v135 = vsel %vm55, %v132, 0.0
  %v136 = vsel %vm56, %v131, 0.0
  %v137 = vsel %vm57, %v130, 0.0
  %138 = vrot.lane.b32.xlu0 %v20, 127
  %v139 = vpop.permute.xlu0 %138
  %140 = vrot.lane.b32.xlu0 %v24, 127
  %v141 = vpop.permute.xlu0 %140
  %142 = vrot.lane.b32.xlu0 %v22, 127
  %v143 = vpop.permute.xlu0 %142
  %144 = vrot.lane.b32.xlu0 %v27, 127
  %v145 = vpop.permute.xlu0 %144
  %vm146 = vcmp.lt.s32.totalorder %v30, 127
  %v147 = vsel %vm146, %v143, %v145
  %v148 = vsel %vm146, %v141, %v143
  %v149 = vsel %vm146, %v139, %v141
  %v150 = vsel %vm146, %v145, %v139
  %v151 = vsel %vm58, %v149, 0.0
  %v152 = vsel %vm59, %v148, 0.0
  %v153 = vsel %vm60, %v147, 0.0
  %v154 = vsel %vm61, %v150, 0.0
  %155 = vrot.lane.b32.xlu0 %v20, 113
  %v156 = vpop.permute.xlu0 %155
  %157 = vrot.lane.b32.xlu0 %v24, 113
  %v158 = vpop.permute.xlu0 %157
  %159 = vrot.lane.b32.xlu0 %v22, 113
  %v160 = vpop.permute.xlu0 %159
  %161 = vrot.lane.b32.xlu0 %v27, 113
  %v162 = vpop.permute.xlu0 %161
  %vm163 = vcmp.lt.s32.totalorder %v30, 113
  %v164 = vsel %vm163, %v160, %v162
  %v165 = vsel %vm163, %v158, %v160
  %v166 = vsel %vm163, %v156, %v158
  %v167 = vsel %vm163, %v162, %v156
  %vm168 = vmand %vm50, %vm54
  %vm169 = vmand %vm51, %vm55
  %vm170 = vmand %vm52, %vm56
  %vm171 = vmand %vm53, %vm57
  %v172 = vsel %vm168, %v166, 0.0
  %v173 = vsel %vm169, %v165, 0.0
  %v174 = vsel %vm170, %v164, 0.0
  %v175 = vsel %vm171, %v167, 0.0
  %176 = vrot.lane.b32.xlu0 %v20, 112
  %v177 = vpop.permute.xlu0 %176
  %178 = vrot.lane.b32.xlu0 %v24, 112
  %v179 = vpop.permute.xlu0 %178
  %180 = vrot.lane.b32.xlu0 %v22, 112
  %v181 = vpop.permute.xlu0 %180
  %182 = vrot.lane.b32.xlu0 %v27, 112
  %v183 = vpop.permute.xlu0 %182
  %vm184 = vcmp.lt.s32.totalorder %v30, 112
  %v185 = vsel %vm184, %v181, %v183
  %v186 = vsel %vm184, %v179, %v181
  %v187 = vsel %vm184, %v177, %v179
  %v188 = vsel %vm184, %v183, %v177
  %v189 = vsel %vm50, %v187, 0.0
  %v190 = vsel %vm51, %v186, 0.0
  %v191 = vsel %vm52, %v185, 0.0
  %v192 = vsel %vm53, %v188, 0.0
  %193 = vrot.lane.b32.xlu0 %v20, 111
  %v194 = vpop.permute.xlu0 %193
  %195 = vrot.lane.b32.xlu0 %v24, 111
  %v196 = vpop.permute.xlu0 %195
  %197 = vrot.lane.b32.xlu0 %v22, 111
  %v198 = vpop.permute.xlu0 %197
  %199 = vrot.lane.b32.xlu0 %v27, 111
  %v200 = vpop.permute.xlu0 %199
  %vm201 = vcmp.lt.s32.totalorder %v30, 111
  %v202 = vsel %vm201, %v198, %v200
  %v203 = vsel %vm201, %v196, %v198
  %v204 = vsel %vm201, %v194, %v196
  %v205 = vsel %vm201, %v200, %v194
  %vm206 = vmand %vm50, %vm58
  %vm207 = vmand %vm51, %vm59
  %vm208 = vmand %vm52, %vm60
  %vm209 = vmand %vm53, %vm61
  %v210 = vsel %vm206, %v204, 0.0
  %v211 = vsel %vm207, %v203, 0.0
  %v212 = vsel %vm208, %v202, 0.0
  %v213 = vsel %vm209, %v205, 0.0
  %v218 = vrot.slane %v96, 4
  %v219 = vrot.slane %v97, 4
  %v220 = vrot.slane %v98, 4
  %v221 = vrot.slane %v99, 4
  %v230 = vrot.slane %v134, 4
  %v231 = vrot.slane %v135, 4
  %v232 = vrot.slane %v136, 4
  %v233 = vrot.slane %v137, 4
  %v242 = vrot.slane %v151, 4
  %v243 = vrot.slane %v152, 4
  %v244 = vrot.slane %v153, 4
  %v245 = vrot.slane %v154, 4
  %v254 = vrot.slane %v189, 4
  %v255 = vrot.slane %v190, 4
  %v256 = vrot.slane %v191, 4
  %v257 = vrot.slane %v192, 4
  %vm262 = vcmask 1043456
  %v263 = vsel %vm262, %v79, %v218
  %v264 = vsel %vm262, %v80, %v219
  %v265 = vsel %vm262, %v81, %v220
  %v266 = vsel %vm262, %v82, %v221
  %v267 = vsel %vm262, %v117, %v230
  %v268 = vsel %vm262, %v118, %v231
  %v269 = vsel %vm262, %v119, %v232
  %v270 = vsel %vm262, %v120, %v233
  %v271 = vsel %vm262, %v20, %v242
  %v272 = vsel %vm262, %v24, %v243
  %v273 = vsel %vm262, %v22, %v244
  %v274 = vsel %vm262, %v27, %v245
  %v275 = vsel %vm262, %v172, %v254
  %v276 = vsel %vm262, %v173, %v255
  %v277 = vsel %vm262, %v174, %v256
  %v278 = vsel %vm262, %v175, %v257
  %v279 = vld [vmem:[%s1] sm:$0xff]
  %v280 = vld [vmem:[%s2] sm:$0xff]
  %282 = vset.pattern.permute.xlu0 0
  %283 = vperm.xlu0 %282, %v280
  %v284 = vpop.permute.xlu0 %283
  %vm286 = vcmask 293888
  %v288 = vsel %vm286, %v279, 0
  %v291 = vsel %vm262, %v210, 0
  %v294 = vsel %vm262, %v211, 0
  %v297 = vsel %vm262, %v212, 0
  %v300 = vsel %vm262, %v213, 0
  %302 = vmatprep.subr.mxu0 %v264
  %303 = vmatpush1.msra.mxu0 %v263
  %304 = vmatprep.subr.mxu0 %v268
  %305 = vmatpush1.msra.mxu0 %v267
  %306 = vmatprep.subr.mxu0 %v272
  %307 = vmatpush1.msra.mxu0 %v271
  %308 = vmatprep.subr.mxu0 %v276
  %309 = vmatpush1.msra.mxu0 %v275
  %310 = vmatprep.subr.mxu0 %v294
  %311 = vmatpush1.msra.mxu0 %v291
  %312 = vmatprep.subr.mxu0 0.0
  %313 = vmatpush1.msra.mxu0 0.0
  %314 = vmatprep.subr.mxu0 0.0
  %315 = vmatpush1.msra.mxu0 0.0
  %316 = vmatprep.subr.mxu0 0.0
  %317 = vmatpush1.msra.mxu0 0.0
  %318 = vmatprep.subr.mxu0 0.0
  %319 = vmatpush1.msra.mxu0 0.0
  %320 = vmatprep.subr.mxu0 0.0
  %321 = vmatpush1.msra.mxu0 0.0
  %322 = vmatprep.subr.mxu0 0.0
  %323 = vmatpush1.msra.mxu0 0.0
  %324 = vmatprep.subr.mxu0 0.0
  %325 = vmatpush1.msra.mxu0 0.0
  %326 = vmatprep.subr.mxu0 0.0
  %327 = vmatpush1.msra.mxu0 0.0
  %328 = vmatprep.subr.mxu0 0.0
  %329 = vmatpush1.msra.mxu0 0.0
  %330 = vmatprep.subr.mxu0 0.0
  %331 = vmatpush1.msra.mxu0 0.0
  %332 = vmatprep.subr.mxu0 0.0
  %333 = vmatpush1.msra.mxu0 0.0
  %334 = vmatprep.subr.mxu0 0.0
  %335 = vmatpush1.msra.mxu0 0.0
  %336 = vmatprep.subr.mxu0 0.0
  %337 = vmatpush1.msra.mxu0 0.0
  %338 = vmatprep.subr.mxu0 0.0
  %339 = vmatpush1.msra.mxu0 0.0
  %340 = vmatprep.subr.mxu0 0.0
  %341 = vmatpush1.msra.mxu0 0.0
  %342 = vmatprep.subr.mxu0 0.0
  %343 = vmatpush1.msra.mxu0 0.0
  %344 = vmatprep.subr.mxu0 0.0
  %345 = vmatpush1.msra.mxu0 0.0
  %346 = vmatprep.subr.mxu0 0.0
  %347 = vmatpush1.msra.mxu0 0.0
  %348 = vmatprep.subr.mxu0 0.0
  %349 = vmatpush1.msra.mxu0 0.0
  %350 = vmatprep.subr.mxu0 0.0
  %351 = vmatpush1.msra.mxu0 0.0
  %352 = vmatprep.subr.mxu0 0.0
  %353 = vmatpush1.msra.mxu0 0.0
  %354 = vmatprep.subr.mxu0 0.0
  %355 = vmatpush1.msra.mxu0 0.0
  %356 = vmatprep.subr.mxu0 0.0
  %357 = vmatpush1.msra.mxu0 0.0
  %358 = vmatprep.subr.mxu0 0.0
  %359 = vmatpush1.msra.mxu0 0.0
  %360 = vmatprep.subr.mxu0 0.0
  %361 = vmatpush1.msra.mxu0 0.0
  %362 = vmatprep.subr.mxu0 0.0
  %363 = vmatpush1.msra.mxu0 0.0
  %364 = vmatprep.subr.mxu0 0.0
  %365 = vmatpush1.msra.mxu0 0.0
  %366 = vmatprep.mubr.f32.mxu0 0.0
  %367 = vmatmul.mubr.f32.gmra.mrb[0].mxu0 %v288
  %v368 = vpop.f32.mrb[0].mxu0
  %v369 = vadd.f32 %v284, %v368
  %v370 = vpop.f32.mrb[0].mxu0
  %v371 = vadd.f32 %v284, %v370
  %372 = vdwg.mxu0
  %373 = vmatprep.subr.mxu0 %v266
  %374 = vmatpush1.msra.mxu0 %v265
  %375 = vmatprep.subr.mxu0 %v270
  %376 = vmatpush1.msra.mxu0 %v269
  %377 = vmatprep.subr.mxu0 %v274
  %378 = vmatpush1.msra.mxu0 %v273
  %379 = vmatprep.subr.mxu0 %v278
  %380 = vmatpush1.msra.mxu0 %v277
  %381 = vmatprep.subr.mxu0 %v300
  %382 = vmatpush1.msra.mxu0 %v297
  %383 = vmatprep.subr.mxu0 0.0
  %384 = vmatpush1.msra.mxu0 0.0
  %385 = vmatprep.subr.mxu0 0.0
  %386 = vmatpush1.msra.mxu0 0.0
  %387 = vmatprep.subr.mxu0 0.0
  %388 = vmatpush1.msra.mxu0 0.0
  %389 = vmatprep.subr.mxu0 0.0
  %390 = vmatpush1.msra.mxu0 0.0
  %391 = vmatprep.subr.mxu0 0.0
  %392 = vmatpush1.msra.mxu0 0.0
  %393 = vmatprep.subr.mxu0 0.0
  %394 = vmatpush1.msra.mxu0 0.0
  %395 = vmatprep.subr.mxu0 0.0
  %396 = vmatpush1.msra.mxu0 0.0
  %397 = vmatprep.subr.mxu0 0.0
  %398 = vmatpush1.msra.mxu0 0.0
  %399 = vmatprep.subr.mxu0 0.0
  %400 = vmatpush1.msra.mxu0 0.0
  %401 = vmatprep.subr.mxu0 0.0
  %402 = vmatpush1.msra.mxu0 0.0
  %403 = vmatprep.subr.mxu0 0.0
  %404 = vmatpush1.msra.mxu0 0.0
  %405 = vmatprep.subr.mxu0 0.0
  %406 = vmatpush1.msra.mxu0 0.0
  %407 = vmatprep.subr.mxu0 0.0
  %408 = vmatpush1.msra.mxu0 0.0
  %409 = vmatprep.subr.mxu0 0.0
  %410 = vmatpush1.msra.mxu0 0.0
  %411 = vmatprep.subr.mxu0 0.0
  %412 = vmatpush1.msra.mxu0 0.0
  %413 = vmatprep.subr.mxu0 0.0
  %414 = vmatpush1.msra.mxu0 0.0
  %415 = vmatprep.subr.mxu0 0.0
  %416 = vmatpush1.msra.mxu0 0.0
  %417 = vmatprep.subr.mxu0 0.0
  %418 = vmatpush1.msra.mxu0 0.0
  %419 = vmatprep.subr.mxu0 0.0
  %420 = vmatpush1.msra.mxu0 0.0
  %421 = vmatprep.subr.mxu0 0.0
  %422 = vmatpush1.msra.mxu0 0.0
  %423 = vmatprep.subr.mxu0 0.0
  %424 = vmatpush1.msra.mxu0 0.0
  %425 = vmatprep.subr.mxu0 0.0
  %426 = vmatpush1.msra.mxu0 0.0
  %427 = vmatprep.subr.mxu0 0.0
  %428 = vmatpush1.msra.mxu0 0.0
  %429 = vmatprep.subr.mxu0 0.0
  %430 = vmatpush1.msra.mxu0 0.0
  %431 = vmatprep.subr.mxu0 0.0
  %432 = vmatpush1.msra.mxu0 0.0
  %433 = vmatprep.subr.mxu0 0.0
  %434 = vmatpush1.msra.mxu0 0.0
  %435 = vmatprep.subr.mxu0 0.0
  %436 = vmatpush1.msra.mxu0 0.0
  %437 = vmatprep.mubr.f32.mxu0 0.0
  %438 = vmatmul.mubr.f32.gmra.mrb[0].mxu0 %v288
  %v439 = vpop.f32.mrb[0].mxu0
  %v440 = vadd.f32 %v284, %v439
  %v441 = vpop.f32.mrb[0].mxu0
  %v442 = vadd.f32 %v284, %v441
  %443 = vdwg.mxu0
  %v444 = vmax.f32 %v369, 0.0
  %v445 = vmax.f32 %v371, 0.0
  %v446 = vmax.f32 %v440, 0.0
  %v447 = vmax.f32 %v442, 0.0
  %v448 = vld [vmem:[%s3] sm:$0xff]
  %v449 = vld [vmem:[%s3 + $0x8] sm:$0xff]
  %v450 = vld [vmem:[%s3 + $0x10] sm:$0x7]
  %v451 = vld [vmem:[%s3 + $0x18] sm:$0x7]
  %v452 = vlaneseq
  %v453 = vshrl.u32 %v452, 7
  %v454 = vsub.s32 0, %v453
  %v455 = vrot.slane %v444, %v454
  %v456 = vlaneseq
  %v457 = vshrl.u32 %v456, 7
  %v458 = vsub.s32 0, %v457
  %v459 = vrot.slane %v445, %v458
  %v460 = vmul.f32 %v448, %v455
  %v461 = vmul.f32 %v449, %v459
  %v462 = vmul.f32 %v450, %v455
  %v463 = vmul.f32 %v451, %v459
  %v464 = vadd.f32 %v460, %v461
  %465 = vadd.xlane.f32.xlu0 %v464
  %v466 = vpop.xlane.xlu0 %465
  %vm467 = vcmask 1042432
  %v468 = vsel %vm467, %v462, 0.0
  %v469 = vsel %vm467, %v463, 0.0
  %v470 = vadd.f32 %v468, %v469
  %471 = vadd.xlane.f32.xlu0 %v470
  %v472 = vpop.xlane.xlu0 %471
  %v473 = vlaneseq
  %v474 = vshrl.u32 %v473, 7
  %v475 = vsub.s32 0, %v474
  %v476 = vrot.slane %v446, %v475
  %v477 = vlaneseq
  %v478 = vshrl.u32 %v477, 7
  %v479 = vsub.s32 0, %v478
  %v480 = vrot.slane %v447, %v479
  %v481 = vmul.f32 %v448, %v476
  %v482 = vmul.f32 %v449, %v480
  %v483 = vmul.f32 %v450, %v476
  %v484 = vmul.f32 %v451, %v480
  %v485 = vadd.f32 %v481, %v482
  %486 = vadd.xlane.f32.xlu0 %v485
  %v487 = vpop.xlane.xlu0 %486
  %v488 = vsel %vm467, %v483, 0.0
  %v489 = vsel %vm467, %v484, 0.0
  %v490 = vadd.f32 %v488, %v489
  %491 = vadd.xlane.f32.xlu0 %v490
  %v492 = vpop.xlane.xlu0 %491
  %s493 = scalar_lea.vmem %s3, 32
  %v494 = vld [vmem:[%s493] sm:$0xff]
  %v495 = vld [vmem:[%s493 + $0x8] sm:$0xff]
  %v496 = vld [vmem:[%s493 + $0x10] sm:$0x7]
  %v497 = vld [vmem:[%s493 + $0x18] sm:$0x7]
  %v498 = vlaneseq
  %v499 = vshrl.u32 %v498, 7
  %v500 = vsub.s32 1, %v499
  %v501 = vrot.slane %v444, %v500
  %v502 = vlaneseq
  %v503 = vshrl.u32 %v502, 7
  %v504 = vsub.s32 1, %v503
  %v505 = vrot.slane %v445, %v504
  %v506 = vmul.f32 %v494, %v501
  %v507 = vmul.f32 %v495, %v505
  %v508 = vmul.f32 %v496, %v501
  %v509 = vmul.f32 %v497, %v505
  %v510 = vadd.f32 %v506, %v507
  %511 = vadd.xlane.f32.xlu0 %v510
  %v512 = vpop.xlane.xlu0 %511
  %v513 = vsel %vm467, %v508, 0.0
  %v514 = vsel %vm467, %v509, 0.0
  %v515 = vadd.f32 %v513, %v514
  %516 = vadd.xlane.f32.xlu0 %v515
  %v517 = vpop.xlane.xlu0 %516
  %v518 = vlaneseq
  %v519 = vshrl.u32 %v518, 7
  %v520 = vsub.s32 1, %v519
  %v521 = vrot.slane %v446, %v520
  %v522 = vlaneseq
  %v523 = vshrl.u32 %v522, 7
  %v524 = vsub.s32 1, %v523
  %v525 = vrot.slane %v447, %v524
  %v526 = vmul.f32 %v494, %v521
  %v527 = vmul.f32 %v495, %v525
  %v528 = vmul.f32 %v496, %v521
  %v529 = vmul.f32 %v497, %v525
  %v530 = vadd.f32 %v526, %v527
  %531 = vadd.xlane.f32.xlu0 %v530
  %v532 = vpop.xlane.xlu0 %531
  %v533 = vsel %vm467, %v528, 0.0
  %v534 = vsel %vm467, %v529, 0.0
  %v535 = vadd.f32 %v533, %v534
  %536 = vadd.xlane.f32.xlu0 %v535
  %v537 = vpop.xlane.xlu0 %536
  %s538 = scalar_lea.vmem %s3, 64
  %v539 = vld [vmem:[%s538] sm:$0xff]
  %v540 = vld [vmem:[%s538 + $0x8] sm:$0xff]
  %v541 = vld [vmem:[%s538 + $0x10] sm:$0x7]
  %v542 = vld [vmem:[%s538 + $0x18] sm:$0x7]
  %v543 = vlaneseq
  %v544 = vshrl.u32 %v543, 7
  %v545 = vsub.s32 2, %v544
  %v546 = vrot.slane %v444, %v545
  %v547 = vlaneseq
  %v548 = vshrl.u32 %v547, 7
  %v549 = vsub.s32 2, %v548
  %v550 = vrot.slane %v445, %v549
  %v551 = vmul.f32 %v539, %v546
  %v552 = vmul.f32 %v540, %v550
  %v553 = vmul.f32 %v541, %v546
  %v554 = vmul.f32 %v542, %v550
  %v555 = vadd.f32 %v551, %v552
  %556 = vadd.xlane.f32.xlu0 %v555
  %v557 = vpop.xlane.xlu0 %556
  %v558 = vsel %vm467, %v553, 0.0
  %v559 = vsel %vm467, %v554, 0.0
  %v560 = vadd.f32 %v558, %v559
  %561 = vadd.xlane.f32.xlu0 %v560
  %v562 = vpop.xlane.xlu0 %561
  %v563 = vlaneseq
  %v564 = vshrl.u32 %v563, 7
  %v565 = vsub.s32 2, %v564
  %v566 = vrot.slane %v446, %v565
  %v567 = vlaneseq
  %v568 = vshrl.u32 %v567, 7
  %v569 = vsub.s32 2, %v568
  %v570 = vrot.slane %v447, %v569
  %v571 = vmul.f32 %v539, %v566
  %v572 = vmul.f32 %v540, %v570
  %v573 = vmul.f32 %v541, %v566
  %v574 = vmul.f32 %v542, %v570
  %v575 = vadd.f32 %v571, %v572
  %576 = vadd.xlane.f32.xlu0 %v575
  %v577 = vpop.xlane.xlu0 %576
  %v578 = vsel %vm467, %v573, 0.0
  %v579 = vsel %vm467, %v574, 0.0
  %v580 = vadd.f32 %v578, %v579
  %581 = vadd.xlane.f32.xlu0 %v580
  %v582 = vpop.xlane.xlu0 %581
  %s583 = scalar_lea.vmem %s3, 96
  %v584 = vld [vmem:[%s583] sm:$0xff]
  %v585 = vld [vmem:[%s583 + $0x8] sm:$0xff]
  %v586 = vld [vmem:[%s583 + $0x10] sm:$0x7]
  %v587 = vld [vmem:[%s583 + $0x18] sm:$0x7]
  %v588 = vlaneseq
  %v589 = vshrl.u32 %v588, 7
  %v590 = vsub.s32 3, %v589
  %v591 = vrot.slane %v444, %v590
  %v592 = vlaneseq
  %v593 = vshrl.u32 %v592, 7
  %v594 = vsub.s32 3, %v593
  %v595 = vrot.slane %v445, %v594
  %v596 = vmul.f32 %v584, %v591
  %v597 = vmul.f32 %v585, %v595
  %v598 = vmul.f32 %v586, %v591
  %v599 = vmul.f32 %v587, %v595
  %v600 = vadd.f32 %v596, %v597
  %601 = vadd.xlane.f32.xlu0 %v600
  %v602 = vpop.xlane.xlu0 %601
  %v603 = vsel %vm467, %v598, 0.0
  %v604 = vsel %vm467, %v599, 0.0
  %v605 = vadd.f32 %v603, %v604
  %606 = vadd.xlane.f32.xlu0 %v605
  %v607 = vpop.xlane.xlu0 %606
  %v608 = vlaneseq
  %v609 = vshrl.u32 %v608, 7
  %v610 = vsub.s32 3, %v609
  %v611 = vrot.slane %v446, %v610
  %v612 = vlaneseq
  %v613 = vshrl.u32 %v612, 7
  %v614 = vsub.s32 3, %v613
  %v615 = vrot.slane %v447, %v614
  %v616 = vmul.f32 %v584, %v611
  %v617 = vmul.f32 %v585, %v615
  %v618 = vmul.f32 %v586, %v611
  %v619 = vmul.f32 %v587, %v615
  %v620 = vadd.f32 %v616, %v617
  %621 = vadd.xlane.f32.xlu0 %v620
  %v622 = vpop.xlane.xlu0 %621
  %v623 = vsel %vm467, %v618, 0.0
  %v624 = vsel %vm467, %v619, 0.0
  %v625 = vadd.f32 %v623, %v624
  %626 = vadd.xlane.f32.xlu0 %v625
  %v627 = vpop.xlane.xlu0 %626
  %s628 = scalar_lea.vmem %s3, 128
  %v629 = vld [vmem:[%s628] sm:$0xff]
  %v630 = vld [vmem:[%s628 + $0x8] sm:$0xff]
  %v631 = vld [vmem:[%s628 + $0x10] sm:$0x7]
  %v632 = vld [vmem:[%s628 + $0x18] sm:$0x7]
  %v633 = vlaneseq
  %v634 = vshrl.u32 %v633, 7
  %v635 = vsub.s32 4, %v634
  %v636 = vrot.slane %v444, %v635
  %v637 = vlaneseq
  %v638 = vshrl.u32 %v637, 7
  %v639 = vsub.s32 4, %v638
  %v640 = vrot.slane %v445, %v639
  %v641 = vmul.f32 %v629, %v636
  %v642 = vmul.f32 %v630, %v640
  %v643 = vmul.f32 %v631, %v636
  %v644 = vmul.f32 %v632, %v640
  %v645 = vadd.f32 %v641, %v642
  %646 = vadd.xlane.f32.xlu0 %v645
  %v647 = vpop.xlane.xlu0 %646
  %v648 = vsel %vm467, %v643, 0.0
  %v649 = vsel %vm467, %v644, 0.0
  %v650 = vadd.f32 %v648, %v649
  %651 = vadd.xlane.f32.xlu0 %v650
  %v652 = vpop.xlane.xlu0 %651
  %v653 = vlaneseq
  %v654 = vshrl.u32 %v653, 7
  %v655 = vsub.s32 4, %v654
  %v656 = vrot.slane %v446, %v655
  %v657 = vlaneseq
  %v658 = vshrl.u32 %v657, 7
  %v659 = vsub.s32 4, %v658
  %v660 = vrot.slane %v447, %v659
  %v661 = vmul.f32 %v629, %v656
  %v662 = vmul.f32 %v630, %v660
  %v663 = vmul.f32 %v631, %v656
  %v664 = vmul.f32 %v632, %v660
  %v665 = vadd.f32 %v661, %v662
  %666 = vadd.xlane.f32.xlu0 %v665
  %v667 = vpop.xlane.xlu0 %666
  %v668 = vsel %vm467, %v663, 0.0
  %v669 = vsel %vm467, %v664, 0.0
  %v670 = vadd.f32 %v668, %v669
  %671 = vadd.xlane.f32.xlu0 %v670
  %v672 = vpop.xlane.xlu0 %671
  %s673 = scalar_lea.vmem %s3, 160
  %v674 = vld [vmem:[%s673] sm:$0xff]
  %v675 = vld [vmem:[%s673 + $0x8] sm:$0xff]
  %v676 = vld [vmem:[%s673 + $0x10] sm:$0x7]
  %v677 = vld [vmem:[%s673 + $0x18] sm:$0x7]
  %v678 = vlaneseq
  %v679 = vshrl.u32 %v678, 7
  %v680 = vsub.s32 5, %v679
  %v681 = vrot.slane %v444, %v680
  %v682 = vlaneseq
  %v683 = vshrl.u32 %v682, 7
  %v684 = vsub.s32 5, %v683
  %v685 = vrot.slane %v445, %v684
  %v686 = vmul.f32 %v674, %v681
  %v687 = vmul.f32 %v675, %v685
  %v688 = vmul.f32 %v676, %v681
  %v689 = vmul.f32 %v677, %v685
  %v690 = vadd.f32 %v686, %v687
  %691 = vadd.xlane.f32.xlu0 %v690
  %v692 = vpop.xlane.xlu0 %691
  %v693 = vsel %vm467, %v688, 0.0
  %v694 = vsel %vm467, %v689, 0.0
  %v695 = vadd.f32 %v693, %v694
  %696 = vadd.xlane.f32.xlu0 %v695
  %v697 = vpop.xlane.xlu0 %696
  %v698 = vlaneseq
  %v699 = vshrl.u32 %v698, 7
  %v700 = vsub.s32 5, %v699
  %v701 = vrot.slane %v446, %v700
  %v702 = vlaneseq
  %v703 = vshrl.u32 %v702, 7
  %v704 = vsub.s32 5, %v703
  %v705 = vrot.slane %v447, %v704
  %v706 = vmul.f32 %v674, %v701
  %v707 = vmul.f32 %v675, %v705
  %v708 = vmul.f32 %v676, %v701
  %v709 = vmul.f32 %v677, %v705
  %v710 = vadd.f32 %v706, %v707
  %711 = vadd.xlane.f32.xlu0 %v710
  %v712 = vpop.xlane.xlu0 %711
  %v713 = vsel %vm467, %v708, 0.0
  %v714 = vsel %vm467, %v709, 0.0
  %v715 = vadd.f32 %v713, %v714
  %716 = vadd.xlane.f32.xlu0 %v715
  %v717 = vpop.xlane.xlu0 %716
  %s718 = scalar_lea.vmem %s3, 192
  %v719 = vld [vmem:[%s718] sm:$0xff]
  %v720 = vld [vmem:[%s718 + $0x8] sm:$0xff]
  %v721 = vld [vmem:[%s718 + $0x10] sm:$0x7]
  %v722 = vld [vmem:[%s718 + $0x18] sm:$0x7]
  %v723 = vlaneseq
  %v724 = vshrl.u32 %v723, 7
  %v725 = vsub.s32 6, %v724
  %v726 = vrot.slane %v444, %v725
  %v727 = vlaneseq
  %v728 = vshrl.u32 %v727, 7
  %v729 = vsub.s32 6, %v728
  %v730 = vrot.slane %v445, %v729
  %v731 = vmul.f32 %v719, %v726
  %v732 = vmul.f32 %v720, %v730
  %v733 = vmul.f32 %v721, %v726
  %v734 = vmul.f32 %v722, %v730
  %v735 = vadd.f32 %v731, %v732
  %736 = vadd.xlane.f32.xlu0 %v735
  %v737 = vpop.xlane.xlu0 %736
  %v738 = vsel %vm467, %v733, 0.0
  %v739 = vsel %vm467, %v734, 0.0
  %v740 = vadd.f32 %v738, %v739
  %741 = vadd.xlane.f32.xlu0 %v740
  %v742 = vpop.xlane.xlu0 %741
  %v743 = vlaneseq
  %v744 = vshrl.u32 %v743, 7
  %v745 = vsub.s32 6, %v744
  %v746 = vrot.slane %v446, %v745
  %v747 = vlaneseq
  %v748 = vshrl.u32 %v747, 7
  %v749 = vsub.s32 6, %v748
  %v750 = vrot.slane %v447, %v749
  %v751 = vmul.f32 %v719, %v746
  %v752 = vmul.f32 %v720, %v750
  %v753 = vmul.f32 %v721, %v746
  %v754 = vmul.f32 %v722, %v750
  %v755 = vadd.f32 %v751, %v752
  %756 = vadd.xlane.f32.xlu0 %v755
  %v757 = vpop.xlane.xlu0 %756
  %v758 = vsel %vm467, %v753, 0.0
  %v759 = vsel %vm467, %v754, 0.0
  %v760 = vadd.f32 %v758, %v759
  %761 = vadd.xlane.f32.xlu0 %v760
  %v762 = vpop.xlane.xlu0 %761
  %s763 = scalar_lea.vmem %s3, 224
  %v764 = vld [vmem:[%s763] sm:$0xff]
  %v765 = vld [vmem:[%s763 + $0x8] sm:$0xff]
  %v766 = vld [vmem:[%s763 + $0x10] sm:$0x7]
  %v767 = vld [vmem:[%s763 + $0x18] sm:$0x7]
  %v768 = vlaneseq
  %v769 = vshrl.u32 %v768, 7
  %v770 = vsub.s32 7, %v769
  %v771 = vrot.slane %v444, %v770
  %v772 = vlaneseq
  %v773 = vshrl.u32 %v772, 7
  %v774 = vsub.s32 7, %v773
  %v775 = vrot.slane %v445, %v774
  %v776 = vmul.f32 %v764, %v771
  %v777 = vmul.f32 %v765, %v775
  %v778 = vmul.f32 %v766, %v771
  %v779 = vmul.f32 %v767, %v775
  %v780 = vadd.f32 %v776, %v777
  %781 = vadd.xlane.f32.xlu0 %v780
  %v782 = vpop.xlane.xlu0 %781
  %v783 = vsel %vm467, %v778, 0.0
  %v784 = vsel %vm467, %v779, 0.0
  %v785 = vadd.f32 %v783, %v784
  %786 = vadd.xlane.f32.xlu0 %v785
  %v787 = vpop.xlane.xlu0 %786
  %v788 = vlaneseq
  %v789 = vshrl.u32 %v788, 7
  %v790 = vsub.s32 7, %v789
  %v791 = vrot.slane %v446, %v790
  %v792 = vlaneseq
  %v793 = vshrl.u32 %v792, 7
  %v794 = vsub.s32 7, %v793
  %v795 = vrot.slane %v447, %v794
  %v796 = vmul.f32 %v764, %v791
  %v797 = vmul.f32 %v765, %v795
  %v798 = vmul.f32 %v766, %v791
  %v799 = vmul.f32 %v767, %v795
  %v800 = vadd.f32 %v796, %v797
  %801 = vadd.xlane.f32.xlu0 %v800
  %v802 = vpop.xlane.xlu0 %801
  %v803 = vsel %vm467, %v798, 0.0
  %v804 = vsel %vm467, %v799, 0.0
  %v805 = vadd.f32 %v803, %v804
  %806 = vadd.xlane.f32.xlu0 %v805
  %v807 = vpop.xlane.xlu0 %806
  %v808 = vadd.f32 %v466, %v512
  %v809 = vadd.f32 %v472, %v517
  %v810 = vadd.f32 %v557, %v602
  %v811 = vadd.f32 %v562, %v607
  %v812 = vadd.f32 %v647, %v692
  %v813 = vadd.f32 %v652, %v697
  %v814 = vadd.f32 %v737, %v782
  %v815 = vadd.f32 %v742, %v787
  %v816 = vadd.f32 %v808, %v810
  %v817 = vadd.f32 %v809, %v811
  %v818 = vadd.f32 %v812, %v814
  %v819 = vadd.f32 %v813, %v815
  %v820 = vadd.f32 %v816, %v818
  %v821 = vadd.f32 %v817, %v819
  %v822 = vadd.f32 %v487, %v532
  %v823 = vadd.f32 %v492, %v537
  %v824 = vadd.f32 %v577, %v622
  %v825 = vadd.f32 %v582, %v627
  %v826 = vadd.f32 %v667, %v712
  %v827 = vadd.f32 %v672, %v717
  %v828 = vadd.f32 %v757, %v802
  %v829 = vadd.f32 %v762, %v807
  %v830 = vadd.f32 %v822, %v824
  %v831 = vadd.f32 %v823, %v825
  %v832 = vadd.f32 %v826, %v828
  %v833 = vadd.f32 %v827, %v829
  %v834 = vadd.f32 %v830, %v832
  %v835 = vadd.f32 %v831, %v833
  %vm836 = vcmask 7168
  %v837 = vsel %vm836, %v820, %v834
  %v838 = vsel %vm836, %v821, %v835
  %v839 = vld [vmem:[%s4] sm:$0xff]
  %v840 = vld [vmem:[%s4 + $0x8] sm:$0x7]
  %842 = vset.pattern.permute.xlu0 0
  %843 = vperm.xlu0 %842, %v839
  %v844 = vpop.permute.xlu0 %843
  %847 = vset.pattern.permute.xlu0 0
  %848 = vperm.xlu0 %847, %v840
  %v849 = vpop.permute.xlu0 %848
  %v851 = vadd.f32 %v837, %v844
  %v852 = vadd.f32 %v838, %v849
  %v853 = vsub.f32 0.0, %v851
  %v854 = vsub.f32 0.0, %v852
  %v855 = vmul.f32 %v853, 1.442695
  %v856 = vpow.pop %v855
  %v857 = vmul.f32 %v854, 1.442695
  %v858 = vpow.pop %v857
  %v859 = vadd.f32 %v856, 1.0
  %v860 = vadd.f32 %v858, 1.0
  %v861 = vrcp.pop %v859
  %v862 = vmul.f32 1.0, %v861
  %v863 = vrcp.pop %v860
  %v864 = vmul.f32 1.0, %v863
  %v865 = vlaneseq
  %v866 = vshrl.u32 %v865, 7
  %v867 = vadd.s32 %v866, 8
  %vm868 = vcmp.eq.s32.totalorder %v866, 0
  %vm869 = vcmp.eq.s32.totalorder %v867, 0
  %v870 = vsel %vm868, %v862, %v851
  %v871 = vsel %vm869, %v864, %v852
  %vm872 = vcmask 15360
  %873 = vst.msk [vmem:[%s5] sm:$0xff] %vm872, %v870
  %vm874 = vcmask 10240
  %875 = vst.msk [vmem:[%s5 + $0x8] sm:$0x7] %vm874, %v871
  // Predicated region
  $region22: #{custom_model_forward.1} parent=0 // pred_check
    _
  $region23: #{custom_model_forward.1} parent=0 // pred_check_branch
    %877 = sbr.rel (0) target = $region25
  $region24: #{custom_model_forward.1} parent=0 // pred_region
    _
  $region25: #{custom_model_forward.1} parent=0 // pred_fallthru
    _
  // Predicated region
  $region26: #{custom_model_forward.1} parent=0 // pred_check
    _
  $region27: #{custom_model_forward.1} parent=0 // pred_check_branch
    %879 = sbr.rel (0) target = $region29
  $region28: #{custom_model_forward.1} parent=0 // pred_region
    _
  $region29: #{custom_model_forward.1} parent=0 // pred_fallthru
    _

</llo_original>
